<compile_context>
chip_gen: v7x
topology: tpu7x:2x2x1
jax: 0.10.0
libtpu: 0.0.40
codegen_flags: <defaults>
</compile_context>

<pallas_src>
import functools

import jax
import jax.numpy as jnp
from jax.experimental import pallas as pl
from jax.experimental.pallas import tpu as pltpu


# ----------------------------------------------------------------------------
# Antialiased bilinear resize matrix (torchvision antialias=True triangle filter
# for the square-input case, within fp tolerance).
# TODO(synk): torchvision clamps the support window to integer index bounds before
# normalizing, so edge rows/cols can differ slightly for non-integer scales.
# ----------------------------------------------------------------------------
def resize_matrix(in_size: int, out_size: int) -> jnp.ndarray:
    scale = in_size / out_size
    support = max(scale, 1.0)  # bilinear radius 1.0, scaled for antialias
    j = jnp.arange(in_size, dtype=jnp.float32)[None, :]   # input pixel centres
    i = jnp.arange(out_size, dtype=jnp.float32)[:, None]  # output pixel indices
    center = scale * (i + 0.5)
    x = (j + 0.5 - center) / support
    w = jnp.clip(1.0 - jnp.abs(x), 0.0, None)
    w = w / jnp.sum(w, axis=1, keepdims=True)
    return w.astype(jnp.float32)                           # [out_size, in_size]


# ----------------------------------------------------------------------------
# Pallas kernel: resize block_b images (all C planes each) per grid step.
# ----------------------------------------------------------------------------
def _isr_kernel(img_ref, wh_ref, ww_t_ref, img_out_ref, *, compute_dtype):
    Bblk, C, H, W = img_ref.shape
    S = wh_ref.shape[0]
    P = Bblk * C                                         # image planes this step

    x = img_ref[...].astype(compute_dtype).reshape(P, H, W)
    wh = wh_ref[...]                                     # [S, H]

    # H-contraction, one matmul per plane: Wh[S,H] @ plane[H,W] -> [S,W].
    # H is the lane dim of Wh and the sublane dim of the plane -> no transpose.
    # K=H, N=W keep the MXU well fed even though M=S may be modest.
    planes = [jnp.dot(wh, x[p], preferred_element_type=jnp.float32)
              for p in range(P)]
    u = jnp.concatenate(planes, axis=0).astype(compute_dtype)   # [P*S, W]

    # W-contraction as ONE big MXU matmul (M = Bblk*C*S); the result is already in
    # the output [Bblk, C, S, S] layout -- no per-channel loop, no relayout.
    out = jnp.dot(u, ww_t_ref[...], preferred_element_type=jnp.float32)  # [P*S, S]
    img_out_ref[...] = out.reshape(Bblk, C, S, S).astype(img_out_ref.dtype)


# ----------------------------------------------------------------------------
# Wrapper: forward pass of IntelligentSquareResize for square inputs.
# ----------------------------------------------------------------------------
def intelligent_square_resize(images, boxes, areas, output_size: int,
                              *, compute_dtype=jnp.float32, out_dtype=None,
                              block_b=None):
    """images: [B, C, H, W] (square H==W, any dtype incl. uint8/bf16),
    boxes: [B, N, 4], areas: [B, N]."""
    B, C, H, W = images.shape
    assert H == W, "square inputs -> crop/pad branches are exact no-ops"
    S = int(output_size)
    resize_factor = float(S) / float(max(H, W))
    out_dtype = images.dtype if out_dtype is None else out_dtype
    if jnp.dtype(out_dtype) == jnp.dtype(jnp.uint8):
        out_dtype = compute_dtype  # don't silently truncate filtered output to u8

    # Weight matrices built once on host; Ww pre-transposed so no in-kernel `.T`.
    wh = resize_matrix(H, S).astype(compute_dtype)        # [S, H]
    ww_t = resize_matrix(W, S).T.astype(compute_dtype)    # [W, S]

    # ---- choose how many images to pack per grid step -----------------------
    in_isz = jnp.dtype(images.dtype).itemsize
    out_isz = jnp.dtype(out_dtype).itemsize
    cd_isz = jnp.dtype(compute_dtype).itemsize
    if block_b is None:
        bytes_per_img = C * (H * W * max(in_isz, cd_isz)    # input block (+ cast copy)
                             + S * W * 4                    # f32 intermediate
                             + S * S * out_isz)             # output block
        budget = 8 * 1024 * 1024      # conservative: fits v7x 32 MiB scoped default
        block_b = max(1, min(B, 8, budget // max(bytes_per_img, 1)))
        while block_b > 1 and (B // block_b) < 2:   # keep >=2 steps for both v7x TCs
            block_b -= 1
        while B % block_b:                          # grid must tile the batch exactly
            block_b -= 1
    grid = (B // block_b,)

    flops = 2 * B * C * S * W * (H + S)
    bytes_accessed = (B * C * H * W * in_isz + B * C * S * S * out_isz
                      + (S * H + W * S) * cd_isz)

    kernel = functools.partial(_isr_kernel, compute_dtype=compute_dtype)

    resized = pl.pallas_call(
        kernel,
        out_shape=jax.ShapeDtypeStruct((B, C, S, S), out_dtype),
        grid=grid,
        in_specs=[
            pl.BlockSpec((block_b, C, H, W), lambda b: (b, 0, 0, 0)),  # image block
            pl.BlockSpec((S, H), lambda b: (0, 0)),                    # Wh   (resident)
            pl.BlockSpec((W, S), lambda b: (0, 0)),                    # Ww^T (resident)
        ],
        out_specs=pl.BlockSpec((block_b, C, S, S), lambda b: (b, 0, 0, 0)),
        compiler_params=pltpu.CompilerParams(
            dimension_semantics=("parallel",)),
        cost_estimate=pl.CostEstimate(flops=flops, transcendentals=0,
                                      bytes_accessed=bytes_accessed),
    )(images, wh, ww_t)

    # Box / area scaling: trivial elementwise math, done in plain jnp so XLA fuses it;
    # keeping it out of the kernel removes lane-sparse masked stores + tiny per-step DMAs.
    # Note: module scales area *linearly* by resize_factor (not factor**2); kept as-is.
    new_boxes = boxes.astype(jnp.float32) * resize_factor
    new_areas = areas.astype(jnp.float32) * resize_factor
    return resized, new_boxes, new_areas


# TODO(synk): RandomCrop (host np.random crops + per-box filtering with dynamic output
# counts) and SquarePad's group-of-4 position-dependent padding have no clean static-shape
# Pallas equivalent; they are exact no-ops for the square inputs used here (the module's
# own `continue` branches).


if __name__ == "__main__":
    B, C, H, W = 2, 4, 16, 16      # square inputs -> crop/pad branches skipped
    N = 8                          # boxes per image
    OUTPUT_SIZE = 8                # downscale so antialias weights matter

    key = jax.random.PRNGKey(0)
    k_img, k_box = jax.random.split(key)
    images = jax.random.uniform(k_img, (B, C, H, W), dtype=jnp.float32)
    boxes = jax.random.uniform(k_box, (B, N, 4), dtype=jnp.float32) * H
    areas = (boxes[..., 2] - boxes[..., 0]) * (boxes[..., 3] - boxes[..., 1])

    resized, new_boxes, new_areas = intelligent_square_resize(
        images, boxes, areas, OUTPUT_SIZE)
    jax.block_until_ready((resized, new_boxes, new_areas))

    # sanity: pure-JAX reference of the same math (tolerances are f32-specific;
    # with compute_dtype=bfloat16 use looser, dtype-aware bounds)
    wh = resize_matrix(H, OUTPUT_SIZE)
    ww = resize_matrix(W, OUTPUT_SIZE)
    ref = jnp.einsum('sh,bchw,tw->bcst', wh, images, ww)
    factor = OUTPUT_SIZE / max(H, W)
    assert jnp.allclose(resized, ref, atol=1e-5, rtol=1e-5), "resize mismatch"
    assert jnp.allclose(new_boxes, boxes * factor, atol=1e-5), "box scale mismatch"
    assert jnp.allclose(new_areas, areas * factor, atol=1e-5), "area scale mismatch"

    print("KERNEL_OK")
</pallas_src>

<mosaic_0001>
module attributes {stable_mosaic.version = 11 : i64} {
  func.func @_isr_kernel(%arg0: i32, %arg1: memref<1x4x16x16xf32, #tpu.memory_space<vmem>>, %arg2: memref<8x16xf32, #tpu.memory_space<vmem>>, %arg3: memref<16x8xf32, #tpu.memory_space<vmem>>, %arg4: memref<1x4x8x8xf32, #tpu.memory_space<vmem>>) attributes {dimension_semantics = [#tpu.dimension_semantics<parallel>], iteration_bounds = array<i64: 2>, scalar_prefetch = 0 : i64, scratch_operands = 0 : i64, tpu.core_type = #tpu.core_type<tc>, window_params = [{transform_indices = @transform_0, window_bounds = array<i64: 1, 4, 16, 16>}, {pipeline_mode = #tpu.pipeline_mode<synchronous>, transform_indices = @transform_1, window_bounds = array<i64: 8, 16>}, {pipeline_mode = #tpu.pipeline_mode<synchronous>, transform_indices = @transform_2, window_bounds = array<i64: 16, 8>}, {transform_indices = @transform_3, window_bounds = array<i64: 1, 4, 8, 8>}]} {
    %c0 = arith.constant 0 : index
    %c0_0 = arith.constant 0 : index
    %c0_1 = arith.constant 0 : index
    %c0_2 = arith.constant 0 : index
    %0 = vector.load %arg1[%c0, %c0_0, %c0_1, %c0_2] : memref<1x4x16x16xf32, #tpu.memory_space<vmem>>, vector<1x4x16x16xf32>
    %1 = vector.shape_cast %0 : vector<1x4x16x16xf32> to vector<4x16x16xf32>
    %c0_3 = arith.constant 0 : index
    %c0_4 = arith.constant 0 : index
    %2 = vector.load %arg2[%c0_3, %c0_4] : memref<8x16xf32, #tpu.memory_space<vmem>>, vector<8x16xf32>
    %3 = vector.extract_strided_slice %1 {offsets = [0, 0, 0], sizes = [1, 16, 16], strides = [1, 1, 1]} : vector<4x16x16xf32> to vector<1x16x16xf32>
    %4 = vector.shape_cast %3 : vector<1x16x16xf32> to vector<16x16xf32>
    %cst = arith.constant dense<0.000000e+00> : vector<8x16xf32>
    %5 = tpu.matmul %2, %4, %cst {dimension_numbers = #tpu.dot_dimension_numbers<[1], [0], [0], [1], [0, 0, 1, 1], [], []>} : vector<8x16xf32>, vector<16x16xf32>, vector<8x16xf32> -> vector<8x16xf32>
    %6 = vector.extract_strided_slice %1 {offsets = [1, 0, 0], sizes = [1, 16, 16], strides = [1, 1, 1]} : vector<4x16x16xf32> to vector<1x16x16xf32>
    %7 = vector.shape_cast %6 : vector<1x16x16xf32> to vector<16x16xf32>
    %cst_5 = arith.constant dense<0.000000e+00> : vector<8x16xf32>
    %8 = tpu.matmul %2, %7, %cst_5 {dimension_numbers = #tpu.dot_dimension_numbers<[1], [0], [0], [1], [0, 0, 1, 1], [], []>} : vector<8x16xf32>, vector<16x16xf32>, vector<8x16xf32> -> vector<8x16xf32>
    %9 = vector.extract_strided_slice %1 {offsets = [2, 0, 0], sizes = [1, 16, 16], strides = [1, 1, 1]} : vector<4x16x16xf32> to vector<1x16x16xf32>
    %10 = vector.shape_cast %9 : vector<1x16x16xf32> to vector<16x16xf32>
    %cst_6 = arith.constant dense<0.000000e+00> : vector<8x16xf32>
    %11 = tpu.matmul %2, %10, %cst_6 {dimension_numbers = #tpu.dot_dimension_numbers<[1], [0], [0], [1], [0, 0, 1, 1], [], []>} : vector<8x16xf32>, vector<16x16xf32>, vector<8x16xf32> -> vector<8x16xf32>
    %12 = vector.extract_strided_slice %1 {offsets = [3, 0, 0], sizes = [1, 16, 16], strides = [1, 1, 1]} : vector<4x16x16xf32> to vector<1x16x16xf32>
    %13 = vector.shape_cast %12 : vector<1x16x16xf32> to vector<16x16xf32>
    %cst_7 = arith.constant dense<0.000000e+00> : vector<8x16xf32>
    %14 = tpu.matmul %2, %13, %cst_7 {dimension_numbers = #tpu.dot_dimension_numbers<[1], [0], [0], [1], [0, 0, 1, 1], [], []>} : vector<8x16xf32>, vector<16x16xf32>, vector<8x16xf32> -> vector<8x16xf32>
    %15 = tpu.concatenate %5, %8, %11, %14 in 0 : vector<8x16xf32>, vector<8x16xf32>, vector<8x16xf32>, vector<8x16xf32> -> vector<32x16xf32>
    %c0_8 = arith.constant 0 : index
    %c0_9 = arith.constant 0 : index
    %16 = vector.load %arg3[%c0_8, %c0_9] : memref<16x8xf32, #tpu.memory_space<vmem>>, vector<16x8xf32>
    %cst_10 = arith.constant dense<0.000000e+00> : vector<32x8xf32>
    %17 = tpu.matmul %15, %16, %cst_10 {dimension_numbers = #tpu.dot_dimension_numbers<[1], [0], [0], [1], [0, 0, 1, 1], [], []>} : vector<32x16xf32>, vector<16x8xf32>, vector<32x8xf32> -> vector<32x8xf32>
    %18 = vector.shape_cast %17 : vector<32x8xf32> to vector<1x4x8x8xf32>
    %c0_11 = arith.constant 0 : index
    %c0_12 = arith.constant 0 : index
    %c0_13 = arith.constant 0 : index
    %c0_14 = arith.constant 0 : index
    %19 = vector.load %arg4[%c0_11, %c0_12, %c0_13, %c0_14] : memref<1x4x8x8xf32, #tpu.memory_space<vmem>>, vector<1x4x8x8xf32>
    tpu.vector_store %arg4[%c0_11, %c0_12, %c0_13, %c0_14], %18 {strides = array<i32>} : memref<1x4x8x8xf32, #tpu.memory_space<vmem>>, vector<1x4x8x8xf32>,
    return
  }
  func.func @transform_0(%arg0: i32) -> (i32, i32, i32, i32) {
    %c0_i32 = arith.constant 0 : i32
    %c0_i32_0 = arith.constant 0 : i32
    %c0_i32_1 = arith.constant 0 : i32
    %c0_i32_2 = arith.constant 0 : i32
    return %arg0, %c0_i32, %c0_i32_0, %c0_i32_1 : i32, i32, i32, i32
  }
  func.func @transform_1(%arg0: i32) -> (i32, i32) {
    %c0_i32 = arith.constant 0 : i32
    %c0_i32_0 = arith.constant 0 : i32
    %c0_i32_1 = arith.constant 0 : i32
    return %c0_i32, %c0_i32_0 : i32, i32
  }
  func.func @transform_2(%arg0: i32) -> (i32, i32) {
    %c0_i32 = arith.constant 0 : i32
    %c0_i32_0 = arith.constant 0 : i32
    %c0_i32_1 = arith.constant 0 : i32
    return %c0_i32, %c0_i32_0 : i32, i32
  }
  func.func @transform_3(%arg0: i32) -> (i32, i32, i32, i32) {
    %c0_i32 = arith.constant 0 : i32
    %c0_i32_0 = arith.constant 0 : i32
    %c0_i32_1 = arith.constant 0 : i32
    %c0_i32_2 = arith.constant 0 : i32
    return %arg0, %c0_i32, %c0_i32_0, %c0_i32_1 : i32, i32, i32, i32
  }
}

</mosaic_0001>

<llo_original>
// kernel: tpu_custom_call.1
$region0: #{tpu_custom_call.1}
  #allocation0 [shape = 'u32[]', space=smem, size = 0x4, offset = 0x4, fixed_abs, tag = 'smem constant byte address 0x4 - core index']
  #allocation1 [shape = 'u32[144,128]{1,0:T(1,128)}', space=vmem, size = 0x12000, scoped, tag = 'internal scratch']
  %s0 = inlined_call_operand.hbm [shape: f32[2,4,16,16], index: 0, kind: input, shape index: {}]
  %s1 = inlined_call_operand.vmem [shape: f32[8,16], index: 1, kind: input, shape index: {}]
  %s2 = inlined_call_operand.vmem [shape: f32[16,8], index: 2, kind: input, shape index: {}]
  %s3 = inlined_call_operand.hbm [shape: f32[2,4,8,8], index: 3, kind: output, shape index: {}]
  %s4 = sld [smem:[#allocation0]]
  $region49: #{tpu_custom_call.1} parent=0
    _
  %s6 = ssub.s32 1, %s4
  %s7 = scalar_select 0, %s6, %s4
  $region1: #{tpu_custom_call.1} parent=0
    #allocation2 [shape = 'u8[65536]{0}', space=vmem, size = 0x10000, scoped, tag = 'input window, operand 0']
    #allocation3 [shape = 's32[2]{0}', space=sflag, size = 0x8, scoped, tag = 'scoped memory for tpu_custom_call.1']
    #allocation4 [shape = 's32[2]{0}', space=sflag, size = 0x8, scoped, tag = 'scoped memory for tpu_custom_call.1']
    #allocation5 [shape = 'u8[32768]{0}', space=vmem, size = 0x8000, scoped, tag = 'output window, operand 0']
    %8 = vsyncpa [#allocation3], 0
    %s9 = scalar_lea.sflag [#allocation3], 1
    %10 = vsyncpa %s9, 0
    %11 = vsyncpa [#allocation4], 0
    %s12 = scalar_lea.sflag [#allocation4], 1
    %13 = vsyncpa %s12, 0
    loop: start=0, step=1, limit=4
    $region2: #{tpu_custom_call.1} parent=1 // loop_pre_header
      _
    $region3: #{tpu_custom_call.1} parent=1 // loop_header
      %s15 = sphi 0, %s19
      %p16 = scmp.ge.s32.totalorder %s15, 4
      %s25 = sphi 0, %s27
      %s28 = sphi 0, %s25
      %s29 = sphi 0, %s28
      %s45 = sphi 0, %s29
      %s49 = sphi 0, %s49
      %s51 = sphi 0, %s49
      %s52 = sphi 0, %s51
      %s66 = sphi 0, %s52
      %s70 = sphi 0, %s70
      %s72 = sphi 0, %s70
      %s73 = sphi 0, %s72
      %s87 = sphi 0, %s73
      %s93 = sphi 0, %s95
      %s96 = sphi 0, %s93
      %s97 = sphi 0, %s96
      %s113 = sphi 0, %s97
    $region4: #{tpu_custom_call.1} parent=1 // loop_header_branch
      %18 = sbr.rel (%p16) target = $region8
    $region5: #{tpu_custom_call.1} parent=1 // loop_body
      %s20 = ssub.s32 %s15, 1
      %s21 = ssub.s32 %s15, 2
      %s22 = sadd.s32 %s15, 1
      %s23 = ssub.s32 %s15, %s22
      %p24 = scmp.eq.s32.totalorder %s23, 0
      %s26 = sadd.s32 %s25, 1
      %s27 = scalar_select %p24, %s25, %s26
      %p30 = pneg %p24
      %p31 = scmp.eq.s32.totalorder %s15, 1
      %p32 = por %p30, %p31
      %p33 = scmp.ne.s32.totalorder %s25, %s28
      %p34 = scmp.eq.s32.totalorder %s15, 0
      %p35 = por %p33, %p34
      %p36 = scmp.ne.s32.totalorder %s25, %s28
      %p37 = scmp.eq.s32.totalorder %s20, 1
      %p38 = por %p36, %p37
      %p39 = scmp.ne.s32.totalorder %s28, %s29
      %p40 = scmp.eq.s32.totalorder %s20, 0
      %p41 = por %p39, %p40
      %p42 = scmp.ne.s32.totalorder %s28, %s29
      %p43 = scmp.eq.s32.totalorder %s21, 1
      %p44 = por %p42, %p43
      %p46 = scmp.ne.s32.totalorder %s29, %s45
      %p47 = scmp.eq.s32.totalorder %s21, 0
      %p48 = por %p46, %p47
      %s50 = sadd.s32 %s49, 1
      %p53 = scmp.eq.s32.totalorder %s15, 1
      %p54 = scmp.ne.s32.totalorder %s49, %s51
      %p55 = scmp.eq.s32.totalorder %s15, 0
      %p56 = por %p54, %p55
      %p57 = scmp.ne.s32.totalorder %s49, %s51
      %p58 = scmp.eq.s32.totalorder %s20, 1
      %p59 = por %p57, %p58
      %p60 = scmp.ne.s32.totalorder %s51, %s52
      %p61 = scmp.eq.s32.totalorder %s20, 0
      %p62 = por %p60, %p61
      %p63 = scmp.ne.s32.totalorder %s51, %s52
      %p64 = scmp.eq.s32.totalorder %s21, 1
      %p65 = por %p63, %p64
      %p67 = scmp.ne.s32.totalorder %s52, %s66
      %p68 = scmp.eq.s32.totalorder %s21, 0
      %p69 = por %p67, %p68
      %s71 = sadd.s32 %s70, 1
      %p74 = scmp.eq.s32.totalorder %s15, 1
      %p75 = scmp.ne.s32.totalorder %s70, %s72
      %p76 = scmp.eq.s32.totalorder %s15, 0
      %p77 = por %p75, %p76
      %p78 = scmp.ne.s32.totalorder %s70, %s72
      %p79 = scmp.eq.s32.totalorder %s20, 1
      %p80 = por %p78, %p79
      %p81 = scmp.ne.s32.totalorder %s72, %s73
      %p82 = scmp.eq.s32.totalorder %s20, 0
      %p83 = por %p81, %p82
      %p84 = scmp.ne.s32.totalorder %s72, %s73
      %p85 = scmp.eq.s32.totalorder %s21, 1
      %p86 = por %p84, %p85
      %p88 = scmp.ne.s32.totalorder %s73, %s87
      %p89 = scmp.eq.s32.totalorder %s21, 0
      %p90 = por %p88, %p89
      %s91 = ssub.s32 %s15, %s22
      %p92 = scmp.eq.s32.totalorder %s91, 0
      %s94 = sadd.s32 %s93, 1
      %s95 = scalar_select %p92, %s93, %s94
      %p98 = pneg %p92
      %p99 = scmp.eq.s32.totalorder %s15, 1
      %p100 = por %p98, %p99
      %p101 = scmp.ne.s32.totalorder %s93, %s96
      %p102 = scmp.eq.s32.totalorder %s15, 0
      %p103 = por %p101, %p102
      %p104 = scmp.ne.s32.totalorder %s93, %s96
      %p105 = scmp.eq.s32.totalorder %s20, 1
      %p106 = por %p104, %p105
      %p107 = scmp.ne.s32.totalorder %s96, %s97
      %p108 = scmp.eq.s32.totalorder %s20, 0
      %p109 = por %p107, %p108
      %p110 = scmp.ne.s32.totalorder %s96, %s97
      %p111 = scmp.eq.s32.totalorder %s21, 1
      %p112 = por %p110, %p111
      %p114 = scmp.ne.s32.totalorder %s97, %s113
      %p115 = scmp.eq.s32.totalorder %s21, 0
      %p116 = por %p114, %p115
      %p117 = scmp.le.s32.totalorder 1, %s15
      %p118 = scmp.lt.s32.totalorder %s15, 3
      %p119 = pnand %p117, %p118
      %p120 = pneg %p119
      // Predicated region
      $region9: #{tpu_custom_call.1} parent=5 // pred_check
        _
      $region10: #{tpu_custom_call.1} parent=5 // pred_check_branch
        %122 = sbr.rel (%p119) target = $region12
      $region11: #{tpu_custom_call.1} parent=5 // pred_region
        %s123 = ssub.s32 %s15, 1
        // Predicated region
        $region13: #{tpu_custom_call.1} parent=11 // pred_check
          %p124 = pneg %p62
        $region14: #{tpu_custom_call.1} parent=11 // pred_check_branch
          %126 = sbr.rel (%p124) target = $region16
        $region15: #{tpu_custom_call.1} parent=11 // pred_region
          _
        $region16: #{tpu_custom_call.1} parent=11 // pred_fallthru
          _
        // Predicated region
        $region17: #{tpu_custom_call.1} parent=11 // pred_check
          %p127 = pneg %p83
        $region18: #{tpu_custom_call.1} parent=11 // pred_check_branch
          %129 = sbr.rel (%p127) target = $region20
        $region19: #{tpu_custom_call.1} parent=11 // pred_region
          _
        $region20: #{tpu_custom_call.1} parent=11 // pred_fallthru
          _
      $region12: #{tpu_custom_call.1} parent=5 // pred_fallthru
        _
      %p130 = scmp.lt.s32.totalorder %s15, 2
      // Predicated region
      $region21: #{tpu_custom_call.1} parent=5 // pred_check
        %p131 = pneg %p130
      $region22: #{tpu_custom_call.1} parent=5 // pred_check_branch
        %133 = sbr.rel (%p131) target = $region24
      $region23: #{tpu_custom_call.1} parent=5 // pred_region
        // Predicated region
        $region25: #{tpu_custom_call.1} parent=23 // pred_check
          %p134 = pneg %p35
        $region26: #{tpu_custom_call.1} parent=23 // pred_check_branch
          %136 = sbr.rel (%p134) target = $region28
        $region27: #{tpu_custom_call.1} parent=23 // pred_region
          %s137 = sand.u32 %s25, 1
          %s138 = scalar_lea.sflag [#allocation3], %s137
          %s139 = sand.u32 %s25, 1
          %s140 = smul.addr %s139, 64
          %s141 = scalar_lea.vmem [#allocation2], %s140
          %s143 = ssub.s32 1024, 1024
          %144 = vsyncadd %s138, %s143
          %s145 = smul.addr %s15, 8
          %s146 = smul.addr %s145, 128
          %s147 = scalar_lea.hbm %s0, %s146
          %s148 = sshll.u32 %s141, 4
          %s149 = int_to_ptr.vmem [resolvable:$true] %s148
          %154 = dma.hbm_to_vmem [thread:$0]  %s147, 1024, %s149, %s138, 128, 128, 8
        $region28: #{tpu_custom_call.1} parent=23 // pred_fallthru
          _
      $region24: #{tpu_custom_call.1} parent=5 // pred_fallthru
        _
      %p155 = scmp.le.s32.totalorder 1, %s15
      %p156 = scmp.lt.s32.totalorder %s15, 3
      %p157 = pnand %p155, %p156
      %p158 = pneg %p157
      // Predicated region
      $region29: #{tpu_custom_call.1} parent=5 // pred_check
        _
      $region30: #{tpu_custom_call.1} parent=5 // pred_check_branch
        %160 = sbr.rel (%p157) target = $region32
      $region31: #{tpu_custom_call.1} parent=5 // pred_region
        %s161 = ssub.s32 %s15, 1
        %s162 = sand.u32 %s28, 1
        %s163 = scalar_lea.sflag [#allocation3], %s162
        %s164 = sand.u32 %s28, 1
        %s165 = smul.addr %s164, 64
        %s166 = scalar_lea.vmem [#allocation2], %s165
        // Predicated region
        $region33: #{tpu_custom_call.1} parent=31 // pred_check
          %p167 = pneg %p41
        $region34: #{tpu_custom_call.1} parent=31 // pred_check_branch
          %169 = sbr.rel (%p167) target = $region36
        $region35: #{tpu_custom_call.1} parent=31 // pred_region
          %170 = dma.done %s163, 1024
        $region36: #{tpu_custom_call.1} parent=31 // pred_fallthru
          _
        %s171 = sand.u32 %s28, 1
        %s172 = scalar_lea.sflag [#allocation3], %s171
        %s173 = sand.u32 %s28, 1
        %s174 = smul.addr %s173, 64
        %s175 = scalar_lea.vmem [#allocation2], %s174
        %p176 = pneg %p41
        %p177 = pneg %p38
        %p178 = pneg %p62
        %p179 = pneg %p59
        %p180 = pneg %p83
        %p181 = pneg %p80
        %p182 = pneg %p109
        %p183 = pneg %p106
        %s184 = sand.u32 %s96, 1
        %s185 = scalar_lea.sflag [#allocation4], %s184
        %s186 = sand.u32 %s96, 1
        %s187 = smul.addr %s186, 32
        %s188 = scalar_lea.vmem [#allocation5], %s187
        %v189 = vld [vmem:[%s166] sm:$0xff]
        %v190 = vld [vmem:[%s166 + $0x8] sm:$0xff]
        %v191 = vld [vmem:[%s166 + $0x10] sm:$0xff]
        %v192 = vld [vmem:[%s166 + $0x18] sm:$0xff]
        %v193 = vld [vmem:[%s166 + $0x20] sm:$0xff]
        %v194 = vld [vmem:[%s166 + $0x28] sm:$0xff]
        %v195 = vld [vmem:[%s166 + $0x30] sm:$0xff]
        %v196 = vld [vmem:[%s166 + $0x38] sm:$0xff]
        %v197 = vld [vmem:[%s1] sm:$0xff]
        %vm198 = vcmask 130048
        %v200 = vsel %vm198, %v197, 0
        %202 = vmatprep.subr.mxu0 0.0
        %203 = vmatpush1.msra.mxu0 %v189
        %204 = vmatprep.subr.mxu0 0.0
        %205 = vmatpush1.msra.mxu0 %v190
        %206 = vmatprep.subr.mxu0 0.0
        %207 = vmatpush1.msra.mxu0 0.0
        %208 = vmatprep.subr.mxu0 0.0
        %209 = vmatpush1.msra.mxu0 0.0
        %210 = vmatprep.subr.mxu0 0.0
        %211 = vmatpush1.msra.mxu0 0.0
        %212 = vmatprep.subr.mxu0 0.0
        %213 = vmatpush1.msra.mxu0 0.0
        %214 = vmatprep.subr.mxu0 0.0
        %215 = vmatpush1.msra.mxu0 0.0
        %216 = vmatprep.subr.mxu0 0.0
        %217 = vmatpush1.msra.mxu0 0.0
        %218 = vmatprep.subr.mxu0 0.0
        %219 = vmatpush1.msra.mxu0 0.0
        %220 = vmatprep.subr.mxu0 0.0
        %221 = vmatpush1.msra.mxu0 0.0
        %222 = vmatprep.subr.mxu0 0.0
        %223 = vmatpush1.msra.mxu0 0.0
        %224 = vmatprep.subr.mxu0 0.0
        %225 = vmatpush1.msra.mxu0 0.0
        %226 = vmatprep.subr.mxu0 0.0
        %227 = vmatpush1.msra.mxu0 0.0
        %228 = vmatprep.subr.mxu0 0.0
        %229 = vmatpush1.msra.mxu0 0.0
        %230 = vmatprep.subr.mxu0 0.0
        %231 = vmatpush1.msra.mxu0 0.0
        %232 = vmatprep.subr.mxu0 0.0
        %233 = vmatpush1.msra.mxu0 0.0
        %234 = vmatprep.subr.mxu0 0.0
        %235 = vmatpush1.msra.mxu0 0.0
        %236 = vmatprep.subr.mxu0 0.0
        %237 = vmatpush1.msra.mxu0 0.0
        %238 = vmatprep.subr.mxu0 0.0
        %239 = vmatpush1.msra.mxu0 0.0
        %240 = vmatprep.subr.mxu0 0.0
        %241 = vmatpush1.msra.mxu0 0.0
        %242 = vmatprep.subr.mxu0 0.0
        %243 = vmatpush1.msra.mxu0 0.0
        %244 = vmatprep.subr.mxu0 0.0
        %245 = vmatpush1.msra.mxu0 0.0
        %246 = vmatprep.subr.mxu0 0.0
        %247 = vmatpush1.msra.mxu0 0.0
        %248 = vmatprep.subr.mxu0 0.0
        %249 = vmatpush1.msra.mxu0 0.0
        %250 = vmatprep.subr.mxu0 0.0
        %251 = vmatpush1.msra.mxu0 0.0
        %252 = vmatprep.subr.mxu0 0.0
        %253 = vmatpush1.msra.mxu0 0.0
        %254 = vmatprep.subr.mxu0 0.0
        %255 = vmatpush1.msra.mxu0 0.0
        %256 = vmatprep.subr.mxu0 0.0
        %257 = vmatpush1.msra.mxu0 0.0
        %258 = vmatprep.subr.mxu0 0.0
        %259 = vmatpush1.msra.mxu0 0.0
        %260 = vmatprep.subr.mxu0 0.0
        %261 = vmatpush1.msra.mxu0 0.0
        %262 = vmatprep.subr.mxu0 0.0
        %263 = vmatpush1.msra.mxu0 0.0
        %264 = vmatprep.subr.mxu0 0.0
        %265 = vmatpush1.msra.mxu0 0.0
        %266 = vmatprep.mubr.f32.mxu0 0.0
        %267 = vmatmul.mubr.f32.gmra.mrb[0].mxu0 %v200
        %v268 = vpop.f32.mrb[0].mxu0
        %v269 = vadd.f32 0.0, %v268
        %v270 = vpop.f32.mrb[0].mxu0
        %271 = vdwg.mxu0
        %272 = vmatprep.subr.mxu0 0.0
        %273 = vmatpush1.msra.mxu0 %v191
        %274 = vmatprep.subr.mxu0 0.0
        %275 = vmatpush1.msra.mxu0 %v192
        %276 = vmatprep.subr.mxu0 0.0
        %277 = vmatpush1.msra.mxu0 0.0
        %278 = vmatprep.subr.mxu0 0.0
        %279 = vmatpush1.msra.mxu0 0.0
        %280 = vmatprep.subr.mxu0 0.0
        %281 = vmatpush1.msra.mxu0 0.0
        %282 = vmatprep.subr.mxu0 0.0
        %283 = vmatpush1.msra.mxu0 0.0
        %284 = vmatprep.subr.mxu0 0.0
        %285 = vmatpush1.msra.mxu0 0.0
        %286 = vmatprep.subr.mxu0 0.0
        %287 = vmatpush1.msra.mxu0 0.0
        %288 = vmatprep.subr.mxu0 0.0
        %289 = vmatpush1.msra.mxu0 0.0
        %290 = vmatprep.subr.mxu0 0.0
        %291 = vmatpush1.msra.mxu0 0.0
        %292 = vmatprep.subr.mxu0 0.0
        %293 = vmatpush1.msra.mxu0 0.0
        %294 = vmatprep.subr.mxu0 0.0
        %295 = vmatpush1.msra.mxu0 0.0
        %296 = vmatprep.subr.mxu0 0.0
        %297 = vmatpush1.msra.mxu0 0.0
        %298 = vmatprep.subr.mxu0 0.0
        %299 = vmatpush1.msra.mxu0 0.0
        %300 = vmatprep.subr.mxu0 0.0
        %301 = vmatpush1.msra.mxu0 0.0
        %302 = vmatprep.subr.mxu0 0.0
        %303 = vmatpush1.msra.mxu0 0.0
        %304 = vmatprep.subr.mxu0 0.0
        %305 = vmatpush1.msra.mxu0 0.0
        %306 = vmatprep.subr.mxu0 0.0
        %307 = vmatpush1.msra.mxu0 0.0
        %308 = vmatprep.subr.mxu0 0.0
        %309 = vmatpush1.msra.mxu0 0.0
        %310 = vmatprep.subr.mxu0 0.0
        %311 = vmatpush1.msra.mxu0 0.0
        %312 = vmatprep.subr.mxu0 0.0
        %313 = vmatpush1.msra.mxu0 0.0
        %314 = vmatprep.subr.mxu0 0.0
        %315 = vmatpush1.msra.mxu0 0.0
        %316 = vmatprep.subr.mxu0 0.0
        %317 = vmatpush1.msra.mxu0 0.0
        %318 = vmatprep.subr.mxu0 0.0
        %319 = vmatpush1.msra.mxu0 0.0
        %320 = vmatprep.subr.mxu0 0.0
        %321 = vmatpush1.msra.mxu0 0.0
        %322 = vmatprep.subr.mxu0 0.0
        %323 = vmatpush1.msra.mxu0 0.0
        %324 = vmatprep.subr.mxu0 0.0
        %325 = vmatpush1.msra.mxu0 0.0
        %326 = vmatprep.subr.mxu0 0.0
        %327 = vmatpush1.msra.mxu0 0.0
        %328 = vmatprep.subr.mxu0 0.0
        %329 = vmatpush1.msra.mxu0 0.0
        %330 = vmatprep.subr.mxu0 0.0
        %331 = vmatpush1.msra.mxu0 0.0
        %332 = vmatprep.subr.mxu0 0.0
        %333 = vmatpush1.msra.mxu0 0.0
        %334 = vmatprep.subr.mxu0 0.0
        %335 = vmatpush1.msra.mxu0 0.0
        %336 = vmatprep.mubr.f32.mxu0 0.0
        %337 = vmatmul.mubr.f32.gmra.mrb[0].mxu0 %v200
        %v338 = vpop.f32.mrb[0].mxu0
        %v339 = vadd.f32 0.0, %v338
        %v340 = vpop.f32.mrb[0].mxu0
        %341 = vdwg.mxu0
        %342 = vmatprep.subr.mxu0 0.0
        %343 = vmatpush1.msra.mxu0 %v193
        %344 = vmatprep.subr.mxu0 0.0
        %345 = vmatpush1.msra.mxu0 %v194
        %346 = vmatprep.subr.mxu0 0.0
        %347 = vmatpush1.msra.mxu0 0.0
        %348 = vmatprep.subr.mxu0 0.0
        %349 = vmatpush1.msra.mxu0 0.0
        %350 = vmatprep.subr.mxu0 0.0
        %351 = vmatpush1.msra.mxu0 0.0
        %352 = vmatprep.subr.mxu0 0.0
        %353 = vmatpush1.msra.mxu0 0.0
        %354 = vmatprep.subr.mxu0 0.0
        %355 = vmatpush1.msra.mxu0 0.0
        %356 = vmatprep.subr.mxu0 0.0
        %357 = vmatpush1.msra.mxu0 0.0
        %358 = vmatprep.subr.mxu0 0.0
        %359 = vmatpush1.msra.mxu0 0.0
        %360 = vmatprep.subr.mxu0 0.0
        %361 = vmatpush1.msra.mxu0 0.0
        %362 = vmatprep.subr.mxu0 0.0
        %363 = vmatpush1.msra.mxu0 0.0
        %364 = vmatprep.subr.mxu0 0.0
        %365 = vmatpush1.msra.mxu0 0.0
        %366 = vmatprep.subr.mxu0 0.0
        %367 = vmatpush1.msra.mxu0 0.0
        %368 = vmatprep.subr.mxu0 0.0
        %369 = vmatpush1.msra.mxu0 0.0
        %370 = vmatprep.subr.mxu0 0.0
        %371 = vmatpush1.msra.mxu0 0.0
        %372 = vmatprep.subr.mxu0 0.0
        %373 = vmatpush1.msra.mxu0 0.0
        %374 = vmatprep.subr.mxu0 0.0
        %375 = vmatpush1.msra.mxu0 0.0
        %376 = vmatprep.subr.mxu0 0.0
        %377 = vmatpush1.msra.mxu0 0.0
        %378 = vmatprep.subr.mxu0 0.0
        %379 = vmatpush1.msra.mxu0 0.0
        %380 = vmatprep.subr.mxu0 0.0
        %381 = vmatpush1.msra.mxu0 0.0
        %382 = vmatprep.subr.mxu0 0.0
        %383 = vmatpush1.msra.mxu0 0.0
        %384 = vmatprep.subr.mxu0 0.0
        %385 = vmatpush1.msra.mxu0 0.0
        %386 = vmatprep.subr.mxu0 0.0
        %387 = vmatpush1.msra.mxu0 0.0
        %388 = vmatprep.subr.mxu0 0.0
        %389 = vmatpush1.msra.mxu0 0.0
        %390 = vmatprep.subr.mxu0 0.0
        %391 = vmatpush1.msra.mxu0 0.0
        %392 = vmatprep.subr.mxu0 0.0
        %393 = vmatpush1.msra.mxu0 0.0
        %394 = vmatprep.subr.mxu0 0.0
        %395 = vmatpush1.msra.mxu0 0.0
        %396 = vmatprep.subr.mxu0 0.0
        %397 = vmatpush1.msra.mxu0 0.0
        %398 = vmatprep.subr.mxu0 0.0
        %399 = vmatpush1.msra.mxu0 0.0
        %400 = vmatprep.subr.mxu0 0.0
        %401 = vmatpush1.msra.mxu0 0.0
        %402 = vmatprep.subr.mxu0 0.0
        %403 = vmatpush1.msra.mxu0 0.0
        %404 = vmatprep.subr.mxu0 0.0
        %405 = vmatpush1.msra.mxu0 0.0
        %406 = vmatprep.mubr.f32.mxu0 0.0
        %407 = vmatmul.mubr.f32.gmra.mrb[0].mxu0 %v200
        %v408 = vpop.f32.mrb[0].mxu0
        %v409 = vadd.f32 0.0, %v408
        %v410 = vpop.f32.mrb[0].mxu0
        %411 = vdwg.mxu0
        %412 = vmatprep.subr.mxu0 0.0
        %413 = vmatpush1.msra.mxu0 %v195
        %414 = vmatprep.subr.mxu0 0.0
        %415 = vmatpush1.msra.mxu0 %v196
        %416 = vmatprep.subr.mxu0 0.0
        %417 = vmatpush1.msra.mxu0 0.0
        %418 = vmatprep.subr.mxu0 0.0
        %419 = vmatpush1.msra.mxu0 0.0
        %420 = vmatprep.subr.mxu0 0.0
        %421 = vmatpush1.msra.mxu0 0.0
        %422 = vmatprep.subr.mxu0 0.0
        %423 = vmatpush1.msra.mxu0 0.0
        %424 = vmatprep.subr.mxu0 0.0
        %425 = vmatpush1.msra.mxu0 0.0
        %426 = vmatprep.subr.mxu0 0.0
        %427 = vmatpush1.msra.mxu0 0.0
        %428 = vmatprep.subr.mxu0 0.0
        %429 = vmatpush1.msra.mxu0 0.0
        %430 = vmatprep.subr.mxu0 0.0
        %431 = vmatpush1.msra.mxu0 0.0
        %432 = vmatprep.subr.mxu0 0.0
        %433 = vmatpush1.msra.mxu0 0.0
        %434 = vmatprep.subr.mxu0 0.0
        %435 = vmatpush1.msra.mxu0 0.0
        %436 = vmatprep.subr.mxu0 0.0
        %437 = vmatpush1.msra.mxu0 0.0
        %438 = vmatprep.subr.mxu0 0.0
        %439 = vmatpush1.msra.mxu0 0.0
        %440 = vmatprep.subr.mxu0 0.0
        %441 = vmatpush1.msra.mxu0 0.0
        %442 = vmatprep.subr.mxu0 0.0
        %443 = vmatpush1.msra.mxu0 0.0
        %444 = vmatprep.subr.mxu0 0.0
        %445 = vmatpush1.msra.mxu0 0.0
        %446 = vmatprep.subr.mxu0 0.0
        %447 = vmatpush1.msra.mxu0 0.0
        %448 = vmatprep.subr.mxu0 0.0
        %449 = vmatpush1.msra.mxu0 0.0
        %450 = vmatprep.subr.mxu0 0.0
        %451 = vmatpush1.msra.mxu0 0.0
        %452 = vmatprep.subr.mxu0 0.0
        %453 = vmatpush1.msra.mxu0 0.0
        %454 = vmatprep.subr.mxu0 0.0
        %455 = vmatpush1.msra.mxu0 0.0
        %456 = vmatprep.subr.mxu0 0.0
        %457 = vmatpush1.msra.mxu0 0.0
        %458 = vmatprep.subr.mxu0 0.0
        %459 = vmatpush1.msra.mxu0 0.0
        %460 = vmatprep.subr.mxu0 0.0
        %461 = vmatpush1.msra.mxu0 0.0
        %462 = vmatprep.subr.mxu0 0.0
        %463 = vmatpush1.msra.mxu0 0.0
        %464 = vmatprep.subr.mxu0 0.0
        %465 = vmatpush1.msra.mxu0 0.0
        %466 = vmatprep.subr.mxu0 0.0
        %467 = vmatpush1.msra.mxu0 0.0
        %468 = vmatprep.subr.mxu0 0.0
        %469 = vmatpush1.msra.mxu0 0.0
        %470 = vmatprep.subr.mxu0 0.0
        %471 = vmatpush1.msra.mxu0 0.0
        %472 = vmatprep.subr.mxu0 0.0
        %473 = vmatpush1.msra.mxu0 0.0
        %474 = vmatprep.subr.mxu0 0.0
        %475 = vmatpush1.msra.mxu0 0.0
        %476 = vmatprep.mubr.f32.mxu0 0.0
        %477 = vmatmul.mubr.f32.gmra.mrb[0].mxu0 %v200
        %v478 = vpop.f32.mrb[0].mxu0
        %v479 = vadd.f32 0.0, %v478
        %v480 = vpop.f32.mrb[0].mxu0
        %481 = vdwg.mxu0
        %v482 = vld [vmem:[%s2] sm:$0xff]
        %v483 = vld [vmem:[%s2 + $0x8] sm:$0xff]
        %v485 = vsel %vm198, %v269, 0
        %v488 = vsel %vm198, %v339, 0
        %v491 = vsel %vm198, %v409, 0
        %v494 = vsel %vm198, %v479, 0
        %496 = vmatprep.subr.mxu0 0.0
        %497 = vmatpush1.msra.mxu0 %v482
        %498 = vmatprep.subr.mxu0 0.0
        %499 = vmatpush1.msra.mxu0 %v483
        %500 = vmatprep.subr.mxu0 0.0
        %501 = vmatpush1.msra.mxu0 0.0
        %502 = vmatprep.subr.mxu0 0.0
        %503 = vmatpush1.msra.mxu0 0.0
        %504 = vmatprep.subr.mxu0 0.0
        %505 = vmatpush1.msra.mxu0 0.0
        %506 = vmatprep.subr.mxu0 0.0
        %507 = vmatpush1.msra.mxu0 0.0
        %508 = vmatprep.subr.mxu0 0.0
        %509 = vmatpush1.msra.mxu0 0.0
        %510 = vmatprep.subr.mxu0 0.0
        %511 = vmatpush1.msra.mxu0 0.0
        %512 = vmatprep.subr.mxu0 0.0
        %513 = vmatpush1.msra.mxu0 0.0
        %514 = vmatprep.subr.mxu0 0.0
        %515 = vmatpush1.msra.mxu0 0.0
        %516 = vmatprep.subr.mxu0 0.0
        %517 = vmatpush1.msra.mxu0 0.0
        %518 = vmatprep.subr.mxu0 0.0
        %519 = vmatpush1.msra.mxu0 0.0
        %520 = vmatprep.subr.mxu0 0.0
        %521 = vmatpush1.msra.mxu0 0.0
        %522 = vmatprep.subr.mxu0 0.0
        %523 = vmatpush1.msra.mxu0 0.0
        %524 = vmatprep.subr.mxu0 0.0
        %525 = vmatpush1.msra.mxu0 0.0
        %526 = vmatprep.subr.mxu0 0.0
        %527 = vmatpush1.msra.mxu0 0.0
        %528 = vmatprep.subr.mxu0 0.0
        %529 = vmatpush1.msra.mxu0 0.0
        %530 = vmatprep.subr.mxu0 0.0
        %531 = vmatpush1.msra.mxu0 0.0
        %532 = vmatprep.subr.mxu0 0.0
        %533 = vmatpush1.msra.mxu0 0.0
        %534 = vmatprep.subr.mxu0 0.0
        %535 = vmatpush1.msra.mxu0 0.0
        %536 = vmatprep.subr.mxu0 0.0
        %537 = vmatpush1.msra.mxu0 0.0
        %538 = vmatprep.subr.mxu0 0.0
        %539 = vmatpush1.msra.mxu0 0.0
        %540 = vmatprep.subr.mxu0 0.0
        %541 = vmatpush1.msra.mxu0 0.0
        %542 = vmatprep.subr.mxu0 0.0
        %543 = vmatpush1.msra.mxu0 0.0
        %544 = vmatprep.subr.mxu0 0.0
        %545 = vmatpush1.msra.mxu0 0.0
        %546 = vmatprep.subr.mxu0 0.0
        %547 = vmatpush1.msra.mxu0 0.0
        %548 = vmatprep.subr.mxu0 0.0
        %549 = vmatpush1.msra.mxu0 0.0
        %550 = vmatprep.subr.mxu0 0.0
        %551 = vmatpush1.msra.mxu0 0.0
        %552 = vmatprep.subr.mxu0 0.0
        %553 = vmatpush1.msra.mxu0 0.0
        %554 = vmatprep.subr.mxu0 0.0
        %555 = vmatpush1.msra.mxu0 0.0
        %556 = vmatprep.subr.mxu0 0.0
        %557 = vmatpush1.msra.mxu0 0.0
        %558 = vmatprep.subr.mxu0 0.0
        %559 = vmatpush1.msra.mxu0 0.0
        %560 = vmatprep.mubr.f32.mxu0 0.0
        %561 = vmatmul.mubr.f32.gmra.mrb[0].mxu0 %v485
        %v562 = vpop.f32.mrb[0].mxu0
        %v563 = vadd.f32 0.0, %v562
        %v564 = vpop.f32.mrb[0].mxu0
        %565 = vmatprep.mubr.f32.mxu0 0.0
        %566 = vmatmul.mubr.f32.gmra.mrb[0].mxu0 %v488
        %v567 = vpop.f32.mrb[0].mxu0
        %v568 = vadd.f32 0.0, %v567
        %v569 = vpop.f32.mrb[0].mxu0
        %570 = vmatprep.mubr.f32.mxu0 0.0
        %571 = vmatmul.mubr.f32.gmra.mrb[0].mxu0 %v491
        %v572 = vpop.f32.mrb[0].mxu0
        %v573 = vadd.f32 0.0, %v572
        %v574 = vpop.f32.mrb[0].mxu0
        %575 = vmatprep.mubr.f32.mxu0 0.0
        %576 = vmatmul.mubr.f32.gmra.mrb[0].mxu0 %v494
        %v577 = vpop.f32.mrb[0].mxu0
        %v578 = vadd.f32 0.0, %v577
        %v579 = vpop.f32.mrb[0].mxu0
        %580 = vdwg.mxu0
        %vm581 = vcmask 64512
        %582 = vst.msk [vmem:[%s188] sm:$0xff] %vm581, %v563
        %583 = vst.msk [vmem:[%s188 + $0x8] sm:$0xff] %vm581, %v568
        %584 = vst.msk [vmem:[%s188 + $0x10] sm:$0xff] %vm581, %v573
        %585 = vst.msk [vmem:[%s188 + $0x18] sm:$0xff] %vm581, %v578
        %s586 = sand.u32 %s96, 1
        %s587 = scalar_lea.sflag [#allocation4], %s586
        %s588 = sand.u32 %s96, 1
        %s589 = smul.addr %s588, 32
        %s590 = scalar_lea.vmem [#allocation5], %s589
        // Predicated region
        $region37: #{tpu_custom_call.1} parent=31 // pred_check
          %p591 = pneg %p106
        $region38: #{tpu_custom_call.1} parent=31 // pred_check_branch
          %593 = sbr.rel (%p591) target = $region40
        $region39: #{tpu_custom_call.1} parent=31 // pred_region
          %s595 = ssub.s32 512, 512
          %596 = vsyncadd %s587, %s595
          %s597 = smul.addr %s20, 4
          %s598 = smul.addr %s597, 128
          %s599 = scalar_lea.hbm %s3, %s598
          %s600 = sshll.u32 %s590, 4
          %s601 = int_to_ptr.vmem [resolvable:$true] %s600
          %606 = dma.vmem_to_hbm [thread:$0]  %s601, 512, %s599, %s587, 128, 128, 8
        $region40: #{tpu_custom_call.1} parent=31 // pred_fallthru
          _
      $region32: #{tpu_custom_call.1} parent=5 // pred_fallthru
        _
      %p607 = scmp.le.s32.totalorder 2, %s15
      // Predicated region
      $region41: #{tpu_custom_call.1} parent=5 // pred_check
        %p608 = pneg %p607
      $region42: #{tpu_custom_call.1} parent=5 // pred_check_branch
        %610 = sbr.rel (%p608) target = $region44
      $region43: #{tpu_custom_call.1} parent=5 // pred_region
        %s611 = ssub.s32 %s15, 2
        // Predicated region
        $region45: #{tpu_custom_call.1} parent=43 // pred_check
          %p612 = pneg %p112
        $region46: #{tpu_custom_call.1} parent=43 // pred_check_branch
          %614 = sbr.rel (%p612) target = $region48
        $region47: #{tpu_custom_call.1} parent=43 // pred_region
          %s615 = sand.u32 %s97, 1
          %s616 = scalar_lea.sflag [#allocation4], %s615
          %s617 = sand.u32 %s97, 1
          %s618 = smul.addr %s617, 32
          %s619 = scalar_lea.vmem [#allocation5], %s618
          %620 = dma.done %s616, 512
        $region48: #{tpu_custom_call.1} parent=43 // pred_fallthru
          _
      $region44: #{tpu_custom_call.1} parent=5 // pred_fallthru
        _
    $region6: #{tpu_custom_call.1} parent=1 // loop_footer
      %s19 = sadd.s32 1, %s15
    $region7: #{tpu_custom_call.1} parent=1 // loop_footer_branch
      %14 = sbr.rel target = $region3
    $region8: #{tpu_custom_call.1} parent=1 // loop_exit
      _
    %621 = vsyncpa [#allocation3], 1
    %s622 = scalar_lea.sflag [#allocation3], 1
    %623 = vsyncpa %s622, 1
    %624 = vsyncpa [#allocation4], 1
    %s625 = scalar_lea.sflag [#allocation4], 1
    %626 = vsyncpa %s625, 1

</llo_original>
